<compile_context>
chip_gen: v7x
topology: tpu7x:2x2x1
jax: 0.10.0
libtpu: 0.0.40
codegen_flags: <defaults>
</compile_context>

<pallas_src>
import jax
import jax.numpy as jnp
from jax.experimental import pallas as pl
from jax.experimental.pallas import tpu as pltpu

BN_EPS = 1e-5
LEAKY_SLOPE = 0.2
FEATURE_ALIGN = 128        # lane alignment; bump to 256 on v6e/v7x at real widths
BATCH_ALIGN = 16           # bf16 sublane packing granularity
VMEM_BUDGET_BYTES = 48 << 20   # conservative: fits v7x 64 MiB physical VMEM


def _round_up(n, m):
    return ((n + m - 1) // m) * m


def _pad_last(a, m=FEATURE_ALIGN):
    """Zero-pad the last (lane) dim of a 2-D array up to a multiple of m."""
    pad = _round_up(a.shape[-1], m) - a.shape[-1]
    if pad:
        a = jnp.pad(a, ((0, 0), (0, pad)))
    return a


def _pad_2d(a, m=FEATURE_ALIGN):
    """Zero-pad both dims of a 2-D weight up to multiples of m."""
    pr = _round_up(a.shape[0], m) - a.shape[0]
    pc = _round_up(a.shape[1], m) - a.shape[1]
    if pr or pc:
        a = jnp.pad(a, ((0, pr), (0, pc)))
    return a


def _make_fused_kernel(n_hidden, n_real, n_pad):
    """Build the fused whole-network kernel.

    Ref order: x, (W_i, gamma_i, beta_i) * n_hidden, W_last, b_last, out.
    x and all W are bf16 (MXU inputs); gamma/beta/b_last/out are f32.
    NOTE: n_real is baked at trace time -> batch-size change triggers recompile.
    """
    inv_n = 1.0 / float(n_real)
    has_pad_rows = n_pad > n_real

    def kernel(*refs):
        o_ref = refs[-1]
        act_bf16 = refs[0][...]                 # (Np, D0p) bf16, pads are exactly 0

        # Row mask for zero-padded batch rows (hoisted out of the layer loop).
        if has_pad_rows:
            row_ids = jax.lax.broadcasted_iota(jnp.int32, (n_pad, 1), 0)
            row_mask = (row_ids < n_real).astype(jnp.float32)   # (Np, 1)

        for i in range(n_hidden):
            w_ref = refs[1 + 3 * i]
            gamma_ref = refs[2 + 3 * i]
            beta_ref = refs[3 + 3 * i]

            # Linear. Hidden-layer bias is dropped: it cancels exactly with the
            # batch-mean subtraction of the BatchNorm that follows.
            y = jnp.dot(act_bf16, w_ref[...],
                        preferred_element_type=jnp.float32)

            # BatchNorm1d (training mode), one-pass stats. Padded rows of y are
            # exactly zero, so sums over all Np rows equal sums over real rows;
            # inv_n uses the real batch size.
            # (axis-0 sums go through the XLU; an MXU ones-row matmul variant is
            #  only worth it if a bundle dump shows XLU as the binding slot.)
            col_sum = jnp.sum(y, axis=0, keepdims=True)
            col_sumsq = jnp.sum(y * y, axis=0, keepdims=True)
            mean = col_sum * inv_n
            var = jnp.maximum(col_sumsq * inv_n - mean * mean, 0.0)

            # Fold gamma * rsqrt(var + eps) into one per-feature scale/shift.
            scale = gamma_ref[...] * jax.lax.rsqrt(var + BN_EPS)
            shift = beta_ref[...] - scale * mean
            z = y * scale + shift

            # LeakyReLU(0.2) as mul+max (valid since slope in (0,1)).
            act_f32 = jnp.maximum(z, LEAKY_SLOPE * z)
            if has_pad_rows:
                act_f32 = act_f32 * row_mask    # keep padded rows exactly zero
            act_bf16 = act_f32.astype(jnp.bfloat16)

        # Final Linear: bias kept, no BN / activation. Lane-dense f32 store.
        y = jnp.dot(act_bf16, refs[-3][...], preferred_element_type=jnp.float32)
        o_ref[...] = (y + refs[-2][...]).astype(o_ref.dtype)

    return kernel


def prepare_gaonet_bn_params(params):
    """One-time (model-load) padding + casting of all parameters.

    Returns a tuple of device arrays ordered
      (W_0, gamma_0, beta_0, ..., W_{H-1}, gamma_{H-1}, beta_{H-1}, W_last, b_last)
    with W in bf16 and gamma/beta/b_last in f32, all lane-padded to FEATURE_ALIGN.
    """
    n_hidden = len(params["gamma"])
    prepped = []
    for i in range(n_hidden):
        prepped.append(_pad_2d(params["w"][i]).astype(jnp.bfloat16))
        prepped.append(_pad_last(params["gamma"][i]))   # (1, Dp) f32
        prepped.append(_pad_last(params["beta"][i]))    # (1, Dp) f32
    prepped.append(_pad_2d(params["w"][n_hidden]).astype(jnp.bfloat16))
    prepped.append(_pad_last(params["b"][n_hidden]))
    return tuple(prepped)


def gaonet_bn_forward(param_inputs, x, d_out):
    """Forward pass of GaoNetBN as one fused Pallas kernel.

    param_inputs: tuple from prepare_gaonet_bn_params (pre-padded, pre-cast).
    x: (N, lyrs[0]) f32.  d_out: real output width (static).
    """
    n_hidden = (len(param_inputs) - 2) // 3
    n = x.shape[0]
    n_pad = max(_round_up(n, BATCH_ALIGN), BATCH_ALIGN)

    # Only the (tiny) input batch is padded per call; weights are pre-padded.
    d_in_p = param_inputs[0].shape[0]
    xp = jnp.pad(x, ((0, n_pad - n), (0, d_in_p - x.shape[1]))).astype(jnp.bfloat16)

    w_last = param_inputs[-2]
    d_out_p = w_last.shape[1]

    # VMEM residency check (whole-network fusion keeps everything resident).
    param_bytes = sum(int(a.size) * a.dtype.itemsize for a in param_inputs)
    max_width = max(a.shape[1] for a in param_inputs)
    # x + out + roughly 4 live f32 (Np, D) temps per layer step.
    act_bytes = n_pad * d_in_p * 2 + n_pad * d_out_p * 4 + 4 * n_pad * max_width * 4
    assert param_bytes + act_bytes <= VMEM_BUDGET_BYTES, (
        "Activation/parameter slab exceeds the VMEM budget; "
        "needs the TODO(synk) N-tiled two-pass BatchNorm path.")

    inputs = (xp,) + tuple(param_inputs)
    out_p = pl.pallas_call(
        _make_fused_kernel(n_hidden, n, n_pad),
        out_shape=jax.ShapeDtypeStruct((n_pad, d_out_p), jnp.float32),
        in_specs=[pl.BlockSpec(memory_space=pltpu.MemorySpace.VMEM)] * len(inputs),
        out_specs=pl.BlockSpec(memory_space=pltpu.MemorySpace.VMEM),
        compiler_params=pltpu.CompilerParams(vmem_limit_bytes=VMEM_BUDGET_BYTES),
    )(*inputs)
    return out_p[:n, :d_out]


def init_gaonet_bn_params(lyrs, key):
    """Deterministic parameter init (shapes match GaoNetBN.__init__).

    Linear i: weight stored as (in, out), bias (1, out)   [PyTorch-equivalent]
    BatchNorm1d i: gamma = ones, beta = zeros              (PyTorch defaults)
    """
    assert len(lyrs) >= 3
    params = {"w": [], "b": [], "gamma": [], "beta": []}
    n_layers = len(lyrs) - 1
    n_hidden = len(lyrs) - 2
    for i in range(n_layers):
        fan_in, fan_out = lyrs[i], lyrs[i + 1]
        key, kw, kb = jax.random.split(key, 3)
        bound = 1.0 / jnp.sqrt(jnp.float32(fan_in))
        w = jax.random.uniform(kw, (fan_in, fan_out), jnp.float32, -bound, bound)
        b = jax.random.uniform(kb, (1, fan_out), jnp.float32, -bound, bound)
        params["w"].append(w)
        params["b"].append(b)
        if i < n_hidden:
            params["gamma"].append(jnp.ones((1, fan_out), jnp.float32))
            params["beta"].append(jnp.zeros((1, fan_out), jnp.float32))
    return params


def _reference_kernel_math(params, x):
    """Pure-JAX reference using the same arithmetic as the kernel
    (bf16 matmul inputs, dropped hidden bias, one-pass stats, folded scale/shift)."""
    n_hidden = len(params["gamma"])
    inv_n = 1.0 / float(x.shape[0])
    act = x.astype(jnp.bfloat16)
    for i in range(n_hidden):
        y = jnp.dot(act, params["w"][i].astype(jnp.bfloat16),
                    preferred_element_type=jnp.float32)
        mean = jnp.sum(y, axis=0, keepdims=True) * inv_n
        var = jnp.maximum(jnp.sum(y * y, axis=0, keepdims=True) * inv_n - mean * mean,
                          0.0)
        scale = params["gamma"][i] * jax.lax.rsqrt(var + BN_EPS)
        shift = params["beta"][i] - scale * mean
        z = y * scale + shift
        act = jnp.maximum(z, LEAKY_SLOPE * z).astype(jnp.bfloat16)
    y = jnp.dot(act, params["w"][n_hidden].astype(jnp.bfloat16),
                preferred_element_type=jnp.float32)
    return y + params["b"][n_hidden]


def _reference_forward_f32(params, x):
    """Full-precision f32 reference of the original PyTorch forward."""
    n_hidden = len(params["gamma"])
    out = x
    for i in range(n_hidden):
        y = out @ params["w"][i] + params["b"][i]
        mean = jnp.mean(y, axis=0, keepdims=True)
        var = jnp.mean((y - mean) ** 2, axis=0, keepdims=True)
        y = params["gamma"][i] * (y - mean) / jnp.sqrt(var + BN_EPS) + params["beta"][i]
        out = jnp.where(y >= 0.0, y, LEAKY_SLOPE * y)
    return out @ params["w"][n_hidden] + params["b"][n_hidden]


if __name__ == "__main__":
    # Small network: lyrs = [16, 32, 32, 8] -> 2 hidden layers with BN + final linear.
    lyrs = [16, 32, 32, 8]
    batch = 8  # BatchNorm1d needs batch > 1 in training mode

    key = jax.random.PRNGKey(0)
    key, kx = jax.random.split(key)
    x = jax.random.normal(kx, (batch, lyrs[0]), jnp.float32)

    params = init_gaonet_bn_params(lyrs, key)
    prepped = prepare_gaonet_bn_params(params)   # one-time pad/cast (model load)

    fwd = jax.jit(gaonet_bn_forward, static_argnums=(2,))
    out = jax.block_until_ready(fwd(prepped, x, lyrs[-1]))
    assert out.shape == (batch, lyrs[-1])

    # Tight check: kernel logic vs an arithmetically equivalent JAX reference.
    ref_tight = _reference_kernel_math(params, x)
    assert jnp.allclose(out, ref_tight, atol=2e-3, rtol=2e-3), \
        "mismatch vs bf16-matmul reference"

    # Loose check: semantics vs the full-precision f32 PyTorch-style forward
    # (differences come only from bf16 MXU inputs).
    ref_f32 = _reference_forward_f32(params, x)
    assert jnp.allclose(out, ref_f32, atol=5e-2, rtol=5e-2), \
        "mismatch vs f32 reference"

    print("KERNEL_OK")
</pallas_src>

<mosaic_0001>
module attributes {stable_mosaic.version = 11 : i64} {
  func.func @kernel(%arg0: memref<16x128xbf16, #tpu.memory_space<vmem>>, %arg1: memref<128x128xbf16, #tpu.memory_space<vmem>>, %arg2: memref<1x128xf32, #tpu.memory_space<vmem>>, %arg3: memref<1x128xf32, #tpu.memory_space<vmem>>, %arg4: memref<128x128xbf16, #tpu.memory_space<vmem>>, %arg5: memref<1x128xf32, #tpu.memory_space<vmem>>, %arg6: memref<1x128xf32, #tpu.memory_space<vmem>>, %arg7: memref<128x128xbf16, #tpu.memory_space<vmem>>, %arg8: memref<1x128xf32, #tpu.memory_space<vmem>>, %arg9: memref<16x128xf32, #tpu.memory_space<vmem>>) attributes {dimension_semantics = [], scalar_prefetch = 0 : i64, scratch_operands = 0 : i64, tpu.core_type = #tpu.core_type<tc>} {
    %c0 = arith.constant 0 : index
    %c0_0 = arith.constant 0 : index
    %0 = vector.load %arg0[%c0, %c0_0] : memref<16x128xbf16, #tpu.memory_space<vmem>>, vector<16x128xbf16>
    %1 = tpu.iota {dimensions = array<i32: 0>} : vector<16x1xi32>
    %c8_i32 = arith.constant 8 : i32
    %2 = vector.broadcast %c8_i32 : i32 to vector<16x1xi32>
    %3 = arith.cmpi slt, %1, %2 : vector<16x1xi32>
    %4 = arith.extui %3 : vector<16x1xi1> to vector<16x1xi32>
    %5 = arith.sitofp %4 : vector<16x1xi32> to vector<16x1xf32>
    %c0_1 = arith.constant 0 : index
    %c0_2 = arith.constant 0 : index
    %6 = vector.load %arg1[%c0_1, %c0_2] : memref<128x128xbf16, #tpu.memory_space<vmem>>, vector<128x128xbf16>
    %cst = arith.constant dense<0.000000e+00> : vector<16x128xf32>
    %7 = tpu.matmul %0, %6, %cst {dimension_numbers = #tpu.dot_dimension_numbers<[1], [0], [0], [1], [0, 0, 1, 1], [], []>} : vector<16x128xbf16>, vector<128x128xbf16>, vector<16x128xf32> -> vector<16x128xf32>
    %cst_3 = arith.constant dense<0.000000e+00> : vector<128xf32>
    %8 = vector.multi_reduction <add>, %7, %cst_3 [0] : vector<16x128xf32> to vector<128xf32>
    %9 = vector.shape_cast %8 : vector<128xf32> to vector<1x128xf32>
    %10 = arith.mulf %7, %7 : vector<16x128xf32>
    %cst_4 = arith.constant dense<0.000000e+00> : vector<128xf32>
    %11 = vector.multi_reduction <add>, %10, %cst_4 [0] : vector<16x128xf32> to vector<128xf32>
    %12 = vector.shape_cast %11 : vector<128xf32> to vector<1x128xf32>
    %cst_5 = arith.constant 1.250000e-01 : f32
    %13 = vector.broadcast %cst_5 : f32 to vector<1x128xf32>
    %14 = arith.mulf %9, %13 : vector<1x128xf32>
    %cst_6 = arith.constant 1.250000e-01 : f32
    %15 = vector.broadcast %cst_6 : f32 to vector<1x128xf32>
    %16 = arith.mulf %12, %15 : vector<1x128xf32>
    %17 = arith.mulf %14, %14 : vector<1x128xf32>
    %18 = arith.subf %16, %17 : vector<1x128xf32>
    %cst_7 = arith.constant 0.000000e+00 : f32
    %19 = vector.broadcast %cst_7 : f32 to vector<1x128xf32>
    %20 = arith.maximumf %18, %19 : vector<1x128xf32>
    %c0_8 = arith.constant 0 : index
    %c0_9 = arith.constant 0 : index
    %21 = vector.load %arg2[%c0_8, %c0_9] : memref<1x128xf32, #tpu.memory_space<vmem>>, vector<1x128xf32>
    %cst_10 = arith.constant 9.99999974E-6 : f32
    %22 = vector.broadcast %cst_10 : f32 to vector<1x128xf32>
    %23 = arith.addf %20, %22 : vector<1x128xf32>
    %24 = math.rsqrt %23 : vector<1x128xf32>
    %25 = arith.mulf %21, %24 : vector<1x128xf32>
    %c0_11 = arith.constant 0 : index
    %c0_12 = arith.constant 0 : index
    %26 = vector.load %arg3[%c0_11, %c0_12] : memref<1x128xf32, #tpu.memory_space<vmem>>, vector<1x128xf32>
    %27 = arith.mulf %25, %14 : vector<1x128xf32>
    %28 = arith.subf %26, %27 : vector<1x128xf32>
    %29 = vector.broadcast %25 : vector<1x128xf32> to vector<16x128xf32>
    %30 = arith.mulf %7, %29 : vector<16x128xf32>
    %31 = vector.broadcast %28 : vector<1x128xf32> to vector<16x128xf32>
    %32 = arith.addf %30, %31 : vector<16x128xf32>
    %cst_13 = arith.constant 2.000000e-01 : f32
    %33 = vector.broadcast %cst_13 : f32 to vector<16x128xf32>
    %34 = arith.mulf %33, %32 : vector<16x128xf32>
    %35 = arith.maximumf %32, %34 : vector<16x128xf32>
    %36 = vector.broadcast %5 : vector<16x1xf32> to vector<16x128xf32>
    %37 = arith.mulf %35, %36 : vector<16x128xf32>
    %38 = arith.truncf %37 : vector<16x128xf32> to vector<16x128xbf16>
    %c0_14 = arith.constant 0 : index
    %c0_15 = arith.constant 0 : index
    %39 = vector.load %arg4[%c0_14, %c0_15] : memref<128x128xbf16, #tpu.memory_space<vmem>>, vector<128x128xbf16>
    %cst_16 = arith.constant dense<0.000000e+00> : vector<16x128xf32>
    %40 = tpu.matmul %38, %39, %cst_16 {dimension_numbers = #tpu.dot_dimension_numbers<[1], [0], [0], [1], [0, 0, 1, 1], [], []>} : vector<16x128xbf16>, vector<128x128xbf16>, vector<16x128xf32> -> vector<16x128xf32>
    %cst_17 = arith.constant dense<0.000000e+00> : vector<128xf32>
    %41 = vector.multi_reduction <add>, %40, %cst_17 [0] : vector<16x128xf32> to vector<128xf32>
    %42 = vector.shape_cast %41 : vector<128xf32> to vector<1x128xf32>
    %43 = arith.mulf %40, %40 : vector<16x128xf32>
    %cst_18 = arith.constant dense<0.000000e+00> : vector<128xf32>
    %44 = vector.multi_reduction <add>, %43, %cst_18 [0] : vector<16x128xf32> to vector<128xf32>
    %45 = vector.shape_cast %44 : vector<128xf32> to vector<1x128xf32>
    %cst_19 = arith.constant 1.250000e-01 : f32
    %46 = vector.broadcast %cst_19 : f32 to vector<1x128xf32>
    %47 = arith.mulf %42, %46 : vector<1x128xf32>
    %cst_20 = arith.constant 1.250000e-01 : f32
    %48 = vector.broadcast %cst_20 : f32 to vector<1x128xf32>
    %49 = arith.mulf %45, %48 : vector<1x128xf32>
    %50 = arith.mulf %47, %47 : vector<1x128xf32>
    %51 = arith.subf %49, %50 : vector<1x128xf32>
    %cst_21 = arith.constant 0.000000e+00 : f32
    %52 = vector.broadcast %cst_21 : f32 to vector<1x128xf32>
    %53 = arith.maximumf %51, %52 : vector<1x128xf32>
    %c0_22 = arith.constant 0 : index
    %c0_23 = arith.constant 0 : index
    %54 = vector.load %arg5[%c0_22, %c0_23] : memref<1x128xf32, #tpu.memory_space<vmem>>, vector<1x128xf32>
    %cst_24 = arith.constant 9.99999974E-6 : f32
    %55 = vector.broadcast %cst_24 : f32 to vector<1x128xf32>
    %56 = arith.addf %53, %55 : vector<1x128xf32>
    %57 = math.rsqrt %56 : vector<1x128xf32>
    %58 = arith.mulf %54, %57 : vector<1x128xf32>
    %c0_25 = arith.constant 0 : index
    %c0_26 = arith.constant 0 : index
    %59 = vector.load %arg6[%c0_25, %c0_26] : memref<1x128xf32, #tpu.memory_space<vmem>>, vector<1x128xf32>
    %60 = arith.mulf %58, %47 : vector<1x128xf32>
    %61 = arith.subf %59, %60 : vector<1x128xf32>
    %62 = vector.broadcast %58 : vector<1x128xf32> to vector<16x128xf32>
    %63 = arith.mulf %40, %62 : vector<16x128xf32>
    %64 = vector.broadcast %61 : vector<1x128xf32> to vector<16x128xf32>
    %65 = arith.addf %63, %64 : vector<16x128xf32>
    %cst_27 = arith.constant 2.000000e-01 : f32
    %66 = vector.broadcast %cst_27 : f32 to vector<16x128xf32>
    %67 = arith.mulf %66, %65 : vector<16x128xf32>
    %68 = arith.maximumf %65, %67 : vector<16x128xf32>
    %69 = vector.broadcast %5 : vector<16x1xf32> to vector<16x128xf32>
    %70 = arith.mulf %68, %69 : vector<16x128xf32>
    %71 = arith.truncf %70 : vector<16x128xf32> to vector<16x128xbf16>
    %c0_28 = arith.constant 0 : index
    %c0_29 = arith.constant 0 : index
    %72 = vector.load %arg7[%c0_28, %c0_29] : memref<128x128xbf16, #tpu.memory_space<vmem>>, vector<128x128xbf16>
    %cst_30 = arith.constant dense<0.000000e+00> : vector<16x128xf32>
    %73 = tpu.matmul %71, %72, %cst_30 {dimension_numbers = #tpu.dot_dimension_numbers<[1], [0], [0], [1], [0, 0, 1, 1], [], []>} : vector<16x128xbf16>, vector<128x128xbf16>, vector<16x128xf32> -> vector<16x128xf32>
    %c0_31 = arith.constant 0 : index
    %c0_32 = arith.constant 0 : index
    %74 = vector.load %arg8[%c0_31, %c0_32] : memref<1x128xf32, #tpu.memory_space<vmem>>, vector<1x128xf32>
    %75 = vector.broadcast %74 : vector<1x128xf32> to vector<16x128xf32>
    %76 = arith.addf %73, %75 : vector<16x128xf32>
    %c0_33 = arith.constant 0 : index
    %c0_34 = arith.constant 0 : index
    %77 = vector.load %arg9[%c0_33, %c0_34] : memref<16x128xf32, #tpu.memory_space<vmem>>, vector<16x128xf32>
    tpu.vector_store %arg9[%c0_33, %c0_34], %76 {strides = array<i32>} : memref<16x128xf32, #tpu.memory_space<vmem>>, vector<16x128xf32>,
    return
  }
}

</mosaic_0001>

<llo_original>
// kernel: gaonet_bn_forward.1
$region0: #{gaonet_bn_forward.1}
  #allocation0 [shape = 'u32[]', space=smem, size = 0x4, offset = 0x4, fixed_abs, tag = 'smem constant byte address 0x4 - core index']
  #allocation1 [shape = 'u32[144,128]{1,0:T(1,128)}', space=vmem, size = 0x12000, scoped, tag = 'internal scratch']
  %s0 = inlined_call_operand.vmem [shape: bf16[16,128], index: 0, kind: input, shape index: {}]
  %s1 = inlined_call_operand.hbm [shape: bf16[128,128], index: 1, kind: input, shape index: {}]
  %s2 = inlined_call_operand.vmem [shape: f32[1,128], index: 2, kind: input, shape index: {}]
  %s3 = inlined_call_operand.vmem [shape: f32[1,128], index: 3, kind: input, shape index: {}]
  %s4 = inlined_call_operand.hbm [shape: bf16[128,128], index: 4, kind: input, shape index: {}]
  %s5 = inlined_call_operand.vmem [shape: f32[1,128], index: 5, kind: input, shape index: {}]
  %s6 = inlined_call_operand.vmem [shape: f32[1,128], index: 6, kind: input, shape index: {}]
  %s7 = inlined_call_operand.hbm [shape: bf16[128,128], index: 7, kind: input, shape index: {}]
  %s8 = inlined_call_operand.vmem [shape: f32[1,128], index: 8, kind: input, shape index: {}]
  %s9 = inlined_call_operand.vmem [shape: f32[16,128], index: 9, kind: output, shape index: {}]
  %s10 = sld [smem:[#allocation0]]
  $region58: #{gaonet_bn_forward.1} parent=0
    _
  %s12 = ssub.s32 1, %s10
  %s13 = scalar_select 0, %s12, %s10
  $region1: #{gaonet_bn_forward.1} parent=0
    #allocation2 [shape = 'u8[32768]{0}', space=vmem, size = 0x8000, scoped, tag = 'input window, operand 1, single buffered']
    #allocation3 [shape = 's32[1]{0}', space=sflag, size = 0x4, scoped, tag = 'scoped memory for gaonet_bn_forward.1']
    #allocation4 [shape = 'u8[32768]{0}', space=vmem, size = 0x8000, scoped, tag = 'input window, operand 4, single buffered']
    #allocation5 [shape = 's32[1]{0}', space=sflag, size = 0x4, scoped, tag = 'scoped memory for gaonet_bn_forward.1']
    #allocation6 [shape = 'u8[32768]{0}', space=vmem, size = 0x8000, scoped, tag = 'input window, operand 7, single buffered']
    %14 = vsyncpa [#allocation3], 0
    %15 = vsyncpa [#allocation5], 0
    // Predicated region
    $region2: #{gaonet_bn_forward.1} parent=1 // pred_check
      _
    $region3: #{gaonet_bn_forward.1} parent=1 // pred_check_branch
      %17 = sbr.rel (0) target = $region5
    $region4: #{gaonet_bn_forward.1} parent=1 // pred_region
      _
    $region5: #{gaonet_bn_forward.1} parent=1 // pred_fallthru
      _
    // Predicated region
    $region6: #{gaonet_bn_forward.1} parent=1 // pred_check
      _
    $region7: #{gaonet_bn_forward.1} parent=1 // pred_check_branch
      %19 = sbr.rel (0) target = $region9
    $region8: #{gaonet_bn_forward.1} parent=1 // pred_region
      %s21 = ssub.s32 1024, 1024
      %22 = vsyncadd [#allocation3], %s21
      %s23 = sshll.u32 [#allocation2], 4
      %s24 = int_to_ptr.vmem [resolvable:$true] %s23
      %29 = dma.hbm_to_vmem [thread:$0]  %s1, 1024, %s24, [#allocation3], 64, 64, 4
    $region9: #{gaonet_bn_forward.1} parent=1 // pred_fallthru
      _
    // Predicated region
    $region10: #{gaonet_bn_forward.1} parent=1 // pred_check
      _
    $region11: #{gaonet_bn_forward.1} parent=1 // pred_check_branch
      %31 = sbr.rel (0) target = $region13
    $region12: #{gaonet_bn_forward.1} parent=1 // pred_region
      _
    $region13: #{gaonet_bn_forward.1} parent=1 // pred_fallthru
      _
    // Predicated region
    $region14: #{gaonet_bn_forward.1} parent=1 // pred_check
      _
    $region15: #{gaonet_bn_forward.1} parent=1 // pred_check_branch
      %33 = sbr.rel (0) target = $region17
    $region16: #{gaonet_bn_forward.1} parent=1 // pred_region
      _
    $region17: #{gaonet_bn_forward.1} parent=1 // pred_fallthru
      _
    // Predicated region
    $region18: #{gaonet_bn_forward.1} parent=1 // pred_check
      _
    $region19: #{gaonet_bn_forward.1} parent=1 // pred_check_branch
      %35 = sbr.rel (0) target = $region21
    $region20: #{gaonet_bn_forward.1} parent=1 // pred_region
      %s37 = ssub.s32 1024, 1024
      %38 = vsyncadd [#allocation5], %s37
      %s39 = sshll.u32 [#allocation4], 4
      %s40 = int_to_ptr.vmem [resolvable:$true] %s39
      %45 = dma.hbm_to_vmem [thread:$0]  %s4, 1024, %s40, [#allocation5], 64, 64, 4
    $region21: #{gaonet_bn_forward.1} parent=1 // pred_fallthru
      _
    // Predicated region
    $region22: #{gaonet_bn_forward.1} parent=1 // pred_check
      _
    $region23: #{gaonet_bn_forward.1} parent=1 // pred_check_branch
      %47 = sbr.rel (0) target = $region25
    $region24: #{gaonet_bn_forward.1} parent=1 // pred_region
      _
    $region25: #{gaonet_bn_forward.1} parent=1 // pred_fallthru
      _
    // Predicated region
    $region26: #{gaonet_bn_forward.1} parent=1 // pred_check
      _
    $region27: #{gaonet_bn_forward.1} parent=1 // pred_check_branch
      %49 = sbr.rel (0) target = $region29
    $region28: #{gaonet_bn_forward.1} parent=1 // pred_region
      _
    $region29: #{gaonet_bn_forward.1} parent=1 // pred_fallthru
      _
    // Predicated region
    $region30: #{gaonet_bn_forward.1} parent=1 // pred_check
      _
    $region31: #{gaonet_bn_forward.1} parent=1 // pred_check_branch
      %51 = sbr.rel (0) target = $region33
    $region32: #{gaonet_bn_forward.1} parent=1 // pred_region
      %s53 = ssub.s32 1024, 1024
      %54 = vsyncadd [#allocation5], %s53
      %s55 = sshll.u32 [#allocation6], 4
      %s56 = int_to_ptr.vmem [resolvable:$true] %s55
      %61 = dma.hbm_to_vmem [thread:$0]  %s7, 1024, %s56, [#allocation5], 64, 64, 4
    $region33: #{gaonet_bn_forward.1} parent=1 // pred_fallthru
      _
    // Predicated region
    $region34: #{gaonet_bn_forward.1} parent=1 // pred_check
      _
    $region35: #{gaonet_bn_forward.1} parent=1 // pred_check_branch
      %63 = sbr.rel (0) target = $region37
    $region36: #{gaonet_bn_forward.1} parent=1 // pred_region
      _
    $region37: #{gaonet_bn_forward.1} parent=1 // pred_fallthru
      _
    // Predicated region
    $region38: #{gaonet_bn_forward.1} parent=1 // pred_check
      _
    $region39: #{gaonet_bn_forward.1} parent=1 // pred_check_branch
      %65 = sbr.rel (0) target = $region41
    $region40: #{gaonet_bn_forward.1} parent=1 // pred_region
      %66 = dma.done [#allocation3], 1024
    $region41: #{gaonet_bn_forward.1} parent=1 // pred_fallthru
      _
    // Predicated region
    $region42: #{gaonet_bn_forward.1} parent=1 // pred_check
      _
    $region43: #{gaonet_bn_forward.1} parent=1 // pred_check_branch
      %68 = sbr.rel (0) target = $region45
    $region44: #{gaonet_bn_forward.1} parent=1 // pred_region
      %69 = dma.done [#allocation5], 1024
    $region45: #{gaonet_bn_forward.1} parent=1 // pred_fallthru
      _
    // Predicated region
    $region46: #{gaonet_bn_forward.1} parent=1 // pred_check
      _
    $region47: #{gaonet_bn_forward.1} parent=1 // pred_check_branch
      %71 = sbr.rel (0) target = $region49
    $region48: #{gaonet_bn_forward.1} parent=1 // pred_region
      %72 = dma.done [#allocation5], 1024
    $region49: #{gaonet_bn_forward.1} parent=1 // pred_fallthru
      _
    %v74 = vld [vmem:[%s0] sm:$0xf]
    %v75 = vld [vmem:[%s0 + $0x4] sm:$0xf]
    %v76 = vlaneseq
    %v77 = vshrl.u32 %v76, 7
    %v78 = vadd.s32 %v77, 8
    %vm79 = vcmp.lt.s32.totalorder %v77, 8
    %vm80 = vcmp.lt.s32.totalorder %v78, 8
    %v81 = vsel %vm79, 1, 0
    %v82 = vsel %vm80, 1, 0
    %v83 = vcvt.s32.f32 %v81
    %v84 = vcvt.s32.f32 %v82
    %v85 = vld [vmem:[#allocation2] sm:$0xf]
    %v86 = vld [vmem:[#allocation2 + $0x4] sm:$0xf]
    %v87 = vld [vmem:[#allocation2 + $0x8] sm:$0xf]
    %v88 = vld [vmem:[#allocation2 + $0xc] sm:$0xf]
    %v89 = vld [vmem:[#allocation2 + $0x10] sm:$0xf]
    %v90 = vld [vmem:[#allocation2 + $0x14] sm:$0xf]
    %v91 = vld [vmem:[#allocation2 + $0x18] sm:$0xf]
    %v92 = vld [vmem:[#allocation2 + $0x1c] sm:$0xf]
    %v93 = vld [vmem:[#allocation2 + $0x20] sm:$0xf]
    %v94 = vld [vmem:[#allocation2 + $0x24] sm:$0xf]
    %v95 = vld [vmem:[#allocation2 + $0x28] sm:$0xf]
    %v96 = vld [vmem:[#allocation2 + $0x2c] sm:$0xf]
    %v97 = vld [vmem:[#allocation2 + $0x30] sm:$0xf]
    %v98 = vld [vmem:[#allocation2 + $0x34] sm:$0xf]
    %v99 = vld [vmem:[#allocation2 + $0x38] sm:$0xf]
    %v100 = vld [vmem:[#allocation2 + $0x3c] sm:$0xf]
    %v103 = vunpack.c.l.b16 %v74
    %v104 = vunpack.c.l.b16 %v75
    %v105 = vpack.c.b16 %v104, %v103
    %v123 = vunpack.c.l.b16 %v85
    %v124 = vunpack.c.l.b16 %v86
    %v125 = vunpack.c.l.b16 %v87
    %v126 = vunpack.c.l.b16 %v88
    %v127 = vunpack.c.l.b16 %v89
    %v128 = vunpack.c.l.b16 %v90
    %v129 = vunpack.c.l.b16 %v91
    %v130 = vunpack.c.l.b16 %v92
    %v131 = vunpack.c.l.b16 %v93
    %v132 = vunpack.c.l.b16 %v94
    %v133 = vunpack.c.l.b16 %v95
    %v134 = vunpack.c.l.b16 %v96
    %v135 = vunpack.c.l.b16 %v97
    %v136 = vunpack.c.l.b16 %v98
    %v137 = vunpack.c.l.b16 %v99
    %v138 = vunpack.c.l.b16 %v100
    %v139 = vpack.c.b16 %v124, %v123
    %v140 = vpack.c.b16 %v126, %v125
    %v141 = vpack.c.b16 %v128, %v127
    %v142 = vpack.c.b16 %v130, %v129
    %v143 = vpack.c.b16 %v132, %v131
    %v144 = vpack.c.b16 %v134, %v133
    %v145 = vpack.c.b16 %v136, %v135
    %v146 = vpack.c.b16 %v138, %v137
    %155 = vmatprep.subr.bf16.mxu0 0
    %156 = vmatpush1.bf16.msra.mxu0 %v139
    %157 = vmatprep.subr.bf16.mxu0 0
    %158 = vmatpush1.bf16.msra.mxu0 %v140
    %159 = vmatprep.subr.bf16.mxu0 0
    %160 = vmatpush1.bf16.msra.mxu0 %v141
    %161 = vmatprep.subr.bf16.mxu0 0
    %162 = vmatpush1.bf16.msra.mxu0 %v142
    %163 = vmatprep.subr.bf16.mxu0 0
    %164 = vmatpush1.bf16.msra.mxu0 %v143
    %165 = vmatprep.subr.bf16.mxu0 0
    %166 = vmatpush1.bf16.msra.mxu0 %v144
    %167 = vmatprep.subr.bf16.mxu0 0
    %168 = vmatpush1.bf16.msra.mxu0 %v145
    %169 = vmatprep.subr.bf16.mxu0 0
    %170 = vmatpush1.bf16.msra.mxu0 %v146
    %171 = vmatprep.subr.bf16.mxu0 0
    %172 = vmatpush1.bf16.msra.mxu0 0
    %173 = vmatprep.subr.bf16.mxu0 0
    %174 = vmatpush1.bf16.msra.mxu0 0
    %175 = vmatprep.subr.bf16.mxu0 0
    %176 = vmatpush1.bf16.msra.mxu0 0
    %177 = vmatprep.subr.bf16.mxu0 0
    %178 = vmatpush1.bf16.msra.mxu0 0
    %179 = vmatprep.subr.bf16.mxu0 0
    %180 = vmatpush1.bf16.msra.mxu0 0
    %181 = vmatprep.subr.bf16.mxu0 0
    %182 = vmatpush1.bf16.msra.mxu0 0
    %183 = vmatprep.subr.bf16.mxu0 0
    %184 = vmatpush1.bf16.msra.mxu0 0
    %185 = vmatprep.subr.bf16.mxu0 0
    %186 = vmatpush1.bf16.msra.mxu0 0
    %187 = vmatprep.mubr.bf16.mxu0 0
    %188 = vmatmul.mubr.bf16.gmra.mrb[0].mxu0 %v105
    %v189 = vpop.f32.mrb[0].mxu0
    %v190 = vadd.f32 0.0, %v189
    %v191 = vpop.f32.mrb[0].mxu0
    %v192 = vpop.f32.mrb[0].mxu0
    %v193 = vadd.f32 0.0, %v192
    %v194 = vpop.f32.mrb[0].mxu0
    %195 = vdwg.mxu0
    %v196 = vadd.f32 %v190, %v193
    %v197 = vrot.slane %v196, 4
    %v198 = vadd.f32 %v196, %v197
    %v199 = vrot.slane %v198, 2
    %v200 = vadd.f32 %v198, %v199
    %v201 = vrot.slane %v200, 1
    %v202 = vadd.f32 %v200, %v201
    %v203 = vmul.f32 %v190, %v190
    %v204 = vmul.f32 %v193, %v193
    %v205 = vadd.f32 %v203, %v204
    %v206 = vrot.slane %v205, 4
    %v207 = vadd.f32 %v205, %v206
    %v208 = vrot.slane %v207, 2
    %v209 = vadd.f32 %v207, %v208
    %v210 = vrot.slane %v209, 1
    %v211 = vadd.f32 %v209, %v210
    %v212 = vmul.f32 %v202, 0.125
    %v213 = vmul.f32 %v211, 0.125
    %v214 = vmul.f32 %v212, %v212
    %v215 = vsub.f32 %v213, %v214
    %v216 = vmax.f32 %v215, 0.0
    %v217 = vld [vmem:[%s2] sm:$0x1]
    %v218 = vadd.f32 %v216, 1e-05
    %v219 = vrsqrt.pop %v218
    %v220 = vmul.f32 %v217, %v219
    %v221 = vld [vmem:[%s3] sm:$0x1]
    %v222 = vmul.f32 %v220, %v212
    %v223 = vsub.f32 %v221, %v222
    %v225 = vlaneseq
    %v226 = vshrl.u32 %v225, 7
    %v227 = vsub.s32 0, %v226
    %v228 = vrot.slane %v220, %v227
    %v230 = vmul.f32 %v190, %v228
    %v231 = vmul.f32 %v193, %v228
    %v233 = vlaneseq
    %v234 = vshrl.u32 %v233, 7
    %v235 = vsub.s32 0, %v234
    %v236 = vrot.slane %v223, %v235
    %v238 = vadd.f32 %v230, %v236
    %v239 = vadd.f32 %v231, %v236
    %v240 = vmul.f32 %v238, 0.2
    %v241 = vmul.f32 %v239, 0.2
    %v242 = vmax.f32 %v238, %v240
    %v243 = vmax.f32 %v239, %v241
    %v244 = vmul.f32 %v242, %v83
    %v245 = vmul.f32 %v243, %v84
    %v246 = vpack.c.bf16 %v245, %v244
    %v247 = vld [vmem:[#allocation4] sm:$0xf]
    %v248 = vld [vmem:[#allocation4 + $0x4] sm:$0xf]
    %v249 = vld [vmem:[#allocation4 + $0x8] sm:$0xf]
    %v250 = vld [vmem:[#allocation4 + $0xc] sm:$0xf]
    %v251 = vld [vmem:[#allocation4 + $0x10] sm:$0xf]
    %v252 = vld [vmem:[#allocation4 + $0x14] sm:$0xf]
    %v253 = vld [vmem:[#allocation4 + $0x18] sm:$0xf]
    %v254 = vld [vmem:[#allocation4 + $0x1c] sm:$0xf]
    %v255 = vld [vmem:[#allocation4 + $0x20] sm:$0xf]
    %v256 = vld [vmem:[#allocation4 + $0x24] sm:$0xf]
    %v257 = vld [vmem:[#allocation4 + $0x28] sm:$0xf]
    %v258 = vld [vmem:[#allocation4 + $0x2c] sm:$0xf]
    %v259 = vld [vmem:[#allocation4 + $0x30] sm:$0xf]
    %v260 = vld [vmem:[#allocation4 + $0x34] sm:$0xf]
    %v261 = vld [vmem:[#allocation4 + $0x38] sm:$0xf]
    %v262 = vld [vmem:[#allocation4 + $0x3c] sm:$0xf]
    %v279 = vunpack.c.l.b16 %v247
    %v280 = vunpack.c.l.b16 %v248
    %v281 = vunpack.c.l.b16 %v249
    %v282 = vunpack.c.l.b16 %v250
    %v283 = vunpack.c.l.b16 %v251
    %v284 = vunpack.c.l.b16 %v252
    %v285 = vunpack.c.l.b16 %v253
    %v286 = vunpack.c.l.b16 %v254
    %v287 = vunpack.c.l.b16 %v255
    %v288 = vunpack.c.l.b16 %v256
    %v289 = vunpack.c.l.b16 %v257
    %v290 = vunpack.c.l.b16 %v258
    %v291 = vunpack.c.l.b16 %v259
    %v292 = vunpack.c.l.b16 %v260
    %v293 = vunpack.c.l.b16 %v261
    %v294 = vunpack.c.l.b16 %v262
    %v295 = vpack.c.b16 %v280, %v279
    %v296 = vpack.c.b16 %v282, %v281
    %v297 = vpack.c.b16 %v284, %v283
    %v298 = vpack.c.b16 %v286, %v285
    %v299 = vpack.c.b16 %v288, %v287
    %v300 = vpack.c.b16 %v290, %v289
    %v301 = vpack.c.b16 %v292, %v291
    %v302 = vpack.c.b16 %v294, %v293
    %311 = vmatprep.subr.bf16.mxu0 0
    %312 = vmatpush1.bf16.msra.mxu0 %v295
    %313 = vmatprep.subr.bf16.mxu0 0
    %314 = vmatpush1.bf16.msra.mxu0 %v296
    %315 = vmatprep.subr.bf16.mxu0 0
    %316 = vmatpush1.bf16.msra.mxu0 %v297
    %317 = vmatprep.subr.bf16.mxu0 0
    %318 = vmatpush1.bf16.msra.mxu0 %v298
    %319 = vmatprep.subr.bf16.mxu0 0
    %320 = vmatpush1.bf16.msra.mxu0 %v299
    %321 = vmatprep.subr.bf16.mxu0 0
    %322 = vmatpush1.bf16.msra.mxu0 %v300
    %323 = vmatprep.subr.bf16.mxu0 0
    %324 = vmatpush1.bf16.msra.mxu0 %v301
    %325 = vmatprep.subr.bf16.mxu0 0
    %326 = vmatpush1.bf16.msra.mxu0 %v302
    %327 = vmatprep.subr.bf16.mxu0 0
    %328 = vmatpush1.bf16.msra.mxu0 0
    %329 = vmatprep.subr.bf16.mxu0 0
    %330 = vmatpush1.bf16.msra.mxu0 0
    %331 = vmatprep.subr.bf16.mxu0 0
    %332 = vmatpush1.bf16.msra.mxu0 0
    %333 = vmatprep.subr.bf16.mxu0 0
    %334 = vmatpush1.bf16.msra.mxu0 0
    %335 = vmatprep.subr.bf16.mxu0 0
    %336 = vmatpush1.bf16.msra.mxu0 0
    %337 = vmatprep.subr.bf16.mxu0 0
    %338 = vmatpush1.bf16.msra.mxu0 0
    %339 = vmatprep.subr.bf16.mxu0 0
    %340 = vmatpush1.bf16.msra.mxu0 0
    %341 = vmatprep.subr.bf16.mxu0 0
    %342 = vmatpush1.bf16.msra.mxu0 0
    %343 = vmatprep.mubr.bf16.mxu0 0
    %344 = vmatmul.mubr.bf16.gmra.mrb[0].mxu0 %v246
    %v345 = vpop.f32.mrb[0].mxu0
    %v346 = vadd.f32 0.0, %v345
    %v347 = vpop.f32.mrb[0].mxu0
    %v348 = vpop.f32.mrb[0].mxu0
    %v349 = vadd.f32 0.0, %v348
    %v350 = vpop.f32.mrb[0].mxu0
    %351 = vdwg.mxu0
    %v352 = vadd.f32 %v346, %v349
    %v353 = vrot.slane %v352, 4
    %v354 = vadd.f32 %v352, %v353
    %v355 = vrot.slane %v354, 2
    %v356 = vadd.f32 %v354, %v355
    %v357 = vrot.slane %v356, 1
    %v358 = vadd.f32 %v356, %v357
    %v359 = vmul.f32 %v346, %v346
    %v360 = vmul.f32 %v349, %v349
    %v361 = vadd.f32 %v359, %v360
    %v362 = vrot.slane %v361, 4
    %v363 = vadd.f32 %v361, %v362
    %v364 = vrot.slane %v363, 2
    %v365 = vadd.f32 %v363, %v364
    %v366 = vrot.slane %v365, 1
    %v367 = vadd.f32 %v365, %v366
    %v368 = vmul.f32 %v358, 0.125
    %v369 = vmul.f32 %v367, 0.125
    %v370 = vmul.f32 %v368, %v368
    %v371 = vsub.f32 %v369, %v370
    %v372 = vmax.f32 %v371, 0.0
    %v373 = vld [vmem:[%s5] sm:$0x1]
    %v374 = vadd.f32 %v372, 1e-05
    %v375 = vrsqrt.pop %v374
    %v376 = vmul.f32 %v373, %v375
    %v377 = vld [vmem:[%s6] sm:$0x1]
    %v378 = vmul.f32 %v376, %v368
    %v379 = vsub.f32 %v377, %v378
    %v381 = vlaneseq
    %v382 = vshrl.u32 %v381, 7
    %v383 = vsub.s32 0, %v382
    %v384 = vrot.slane %v376, %v383
    %v386 = vmul.f32 %v346, %v384
    %v387 = vmul.f32 %v349, %v384
    %v389 = vlaneseq
    %v390 = vshrl.u32 %v389, 7
    %v391 = vsub.s32 0, %v390
    %v392 = vrot.slane %v379, %v391
    %v394 = vadd.f32 %v386, %v392
    %v395 = vadd.f32 %v387, %v392
    %v396 = vmul.f32 %v394, 0.2
    %v397 = vmul.f32 %v395, 0.2
    %v398 = vmax.f32 %v394, %v396
    %v399 = vmax.f32 %v395, %v397
    %v400 = vmul.f32 %v398, %v83
    %v401 = vmul.f32 %v399, %v84
    %v402 = vpack.c.bf16 %v401, %v400
    %v403 = vld [vmem:[#allocation6] sm:$0xf]
    %v404 = vld [vmem:[#allocation6 + $0x4] sm:$0xf]
    %v405 = vld [vmem:[#allocation6 + $0x8] sm:$0xf]
    %v406 = vld [vmem:[#allocation6 + $0xc] sm:$0xf]
    %v407 = vld [vmem:[#allocation6 + $0x10] sm:$0xf]
    %v408 = vld [vmem:[#allocation6 + $0x14] sm:$0xf]
    %v409 = vld [vmem:[#allocation6 + $0x18] sm:$0xf]
    %v410 = vld [vmem:[#allocation6 + $0x1c] sm:$0xf]
    %v411 = vld [vmem:[#allocation6 + $0x20] sm:$0xf]
    %v412 = vld [vmem:[#allocation6 + $0x24] sm:$0xf]
    %v413 = vld [vmem:[#allocation6 + $0x28] sm:$0xf]
    %v414 = vld [vmem:[#allocation6 + $0x2c] sm:$0xf]
    %v415 = vld [vmem:[#allocation6 + $0x30] sm:$0xf]
    %v416 = vld [vmem:[#allocation6 + $0x34] sm:$0xf]
    %v417 = vld [vmem:[#allocation6 + $0x38] sm:$0xf]
    %v418 = vld [vmem:[#allocation6 + $0x3c] sm:$0xf]
    %v419 = vld [vmem:[%s8] sm:$0x1]
    %v421 = vlaneseq
    %v422 = vshrl.u32 %v421, 7
    %v423 = vsub.s32 0, %v422
    %v424 = vrot.slane %v419, %v423
    %v442 = vunpack.c.l.b16 %v403
    %v443 = vunpack.c.l.b16 %v404
    %v444 = vunpack.c.l.b16 %v405
    %v445 = vunpack.c.l.b16 %v406
    %v446 = vunpack.c.l.b16 %v407
    %v447 = vunpack.c.l.b16 %v408
    %v448 = vunpack.c.l.b16 %v409
    %v449 = vunpack.c.l.b16 %v410
    %v450 = vunpack.c.l.b16 %v411
    %v451 = vunpack.c.l.b16 %v412
    %v452 = vunpack.c.l.b16 %v413
    %v453 = vunpack.c.l.b16 %v414
    %v454 = vunpack.c.l.b16 %v415
    %v455 = vunpack.c.l.b16 %v416
    %v456 = vunpack.c.l.b16 %v417
    %v457 = vunpack.c.l.b16 %v418
    %v458 = vpack.c.b16 %v443, %v442
    %v459 = vpack.c.b16 %v445, %v444
    %v460 = vpack.c.b16 %v447, %v446
    %v461 = vpack.c.b16 %v449, %v448
    %v462 = vpack.c.b16 %v451, %v450
    %v463 = vpack.c.b16 %v453, %v452
    %v464 = vpack.c.b16 %v455, %v454
    %v465 = vpack.c.b16 %v457, %v456
    %474 = vmatprep.subr.bf16.mxu0 0
    %475 = vmatpush1.bf16.msra.mxu0 %v458
    %476 = vmatprep.subr.bf16.mxu0 0
    %477 = vmatpush1.bf16.msra.mxu0 %v459
    %478 = vmatprep.subr.bf16.mxu0 0
    %479 = vmatpush1.bf16.msra.mxu0 %v460
    %480 = vmatprep.subr.bf16.mxu0 0
    %481 = vmatpush1.bf16.msra.mxu0 %v461
    %482 = vmatprep.subr.bf16.mxu0 0
    %483 = vmatpush1.bf16.msra.mxu0 %v462
    %484 = vmatprep.subr.bf16.mxu0 0
    %485 = vmatpush1.bf16.msra.mxu0 %v463
    %486 = vmatprep.subr.bf16.mxu0 0
    %487 = vmatpush1.bf16.msra.mxu0 %v464
    %488 = vmatprep.subr.bf16.mxu0 0
    %489 = vmatpush1.bf16.msra.mxu0 %v465
    %490 = vmatprep.subr.bf16.mxu0 0
    %491 = vmatpush1.bf16.msra.mxu0 0
    %492 = vmatprep.subr.bf16.mxu0 0
    %493 = vmatpush1.bf16.msra.mxu0 0
    %494 = vmatprep.subr.bf16.mxu0 0
    %495 = vmatpush1.bf16.msra.mxu0 0
    %496 = vmatprep.subr.bf16.mxu0 0
    %497 = vmatpush1.bf16.msra.mxu0 0
    %498 = vmatprep.subr.bf16.mxu0 0
    %499 = vmatpush1.bf16.msra.mxu0 0
    %500 = vmatprep.subr.bf16.mxu0 0
    %501 = vmatpush1.bf16.msra.mxu0 0
    %502 = vmatprep.subr.bf16.mxu0 0
    %503 = vmatpush1.bf16.msra.mxu0 0
    %504 = vmatprep.subr.bf16.mxu0 0
    %505 = vmatpush1.bf16.msra.mxu0 0
    %506 = vmatprep.mubr.bf16.mxu0 0
    %507 = vmatmul.mubr.bf16.gmra.mrb[0].mxu0 %v402
    %v508 = vpop.f32.mrb[0].mxu0
    %v509 = vadd.f32 %v424, %v508
    %v510 = vpop.f32.mrb[0].mxu0
    %v511 = vpop.f32.mrb[0].mxu0
    %v512 = vadd.f32 %v424, %v511
    %v513 = vpop.f32.mrb[0].mxu0
    %514 = vdwg.mxu0
    %515 = vst [vmem:[%s9] sm:$0xff] %v509
    %516 = vst [vmem:[%s9 + $0x8] sm:$0xff] %v512
    // Predicated region
    $region50: #{gaonet_bn_forward.1} parent=1 // pred_check
      _
    $region51: #{gaonet_bn_forward.1} parent=1 // pred_check_branch
      %518 = sbr.rel (0) target = $region53
    $region52: #{gaonet_bn_forward.1} parent=1 // pred_region
      _
    $region53: #{gaonet_bn_forward.1} parent=1 // pred_fallthru
      _
    // Predicated region
    $region54: #{gaonet_bn_forward.1} parent=1 // pred_check
      _
    $region55: #{gaonet_bn_forward.1} parent=1 // pred_check_branch
      %520 = sbr.rel (0) target = $region57
    $region56: #{gaonet_bn_forward.1} parent=1 // pred_region
      _
    $region57: #{gaonet_bn_forward.1} parent=1 // pred_fallthru
      _
    %521 = vsyncpa [#allocation3], 1
    %522 = vsyncpa [#allocation5], 1

</llo_original>
